<compile_context>
chip_gen: v7x
topology: tpu7x:2x2x1
jax: 0.10.0
libtpu: 0.0.40
codegen_flags: <defaults>
</compile_context>

<pallas_src>
import functools

import numpy as np
import jax
import jax.numpy as jnp
from jax.experimental import pallas as pl
from jax.experimental.pallas import tpu as pltpu


def eca_kernel(x_ref, h_ref, n_ref, wx_ref, wh_ref, wn_ref,
               cwm_ref, cbias_ref, bx_ref, out_ref, *, strip, n_strips, E):
    def compute_strip(off):
        xs = x_ref[pl.ds(off, strip), :]
        hs = h_ref[pl.ds(off, strip), :]
        ns = n_ref[pl.ds(off, strip), :]

        # Fused projection: lanes [0,E) = plain x-embedding (bias added below),
        # lanes [E+k*E, E+(k+1)*E) = conv tap k of the E selected channels.
        full = (jnp.dot(xs, wx_ref[...], preferred_element_type=jnp.float32)
                + jnp.dot(hs, wh_ref[...], preferred_element_type=jnp.float32)
                + jnp.dot(ns, wn_ref[...], preferred_element_type=jnp.float32))

        xe = full[:, :E] + bx_ref[...]              # lane offset 0: cheap slice

        # Depthwise Conv1d(kernel=5, padding=3) restricted to the E channels
        # that survive the inverse shuffle: per-row (per-time-step) tap scale,
        # then exact f32 adds of the 5 tap blocks, plus the folded bias.
        w = full * cwm_ref[...]
        conv = (w[:, E:2 * E] + w[:, 2 * E:3 * E] + w[:, 3 * E:4 * E]
                + w[:, 4 * E:5 * E] + w[:, 5 * E:6 * E]) + cbias_ref[...]

        # ReLU (the module's `self.relu = ReLU` bug is implemented as the
        # intended elementwise op), softmax over the E channels, then gate.
        xx = jnp.maximum(conv, 0.0)
        m = jnp.max(xx, axis=-1, keepdims=True)
        e = jnp.exp(xx - m)
        sm = e / jnp.sum(e, axis=-1, keepdims=True)
        out_ref[pl.ds(off, strip), :] = xe * sm

    if n_strips == 1:
        compute_strip(0)
    else:
        def body(s, carry):
            compute_strip(pl.multiple_of(s * strip, strip))
            return carry
        jax.lax.fori_loop(0, n_strips, body, 0)


def fold_eca_params(raw, shuffle, E):
    """Fold shuffle + conv-tap gather + un-shuffle/select into the weights."""
    wx = np.asarray(raw["wx"], np.float32)            # [Xs, E]
    wh = np.asarray(raw["wh"], np.float32)            # [Hin, E]
    wn = np.asarray(raw["wn"], np.float32)            # [Nin, E]
    bx = np.asarray(raw["bx"], np.float32).reshape(-1)
    bh = np.asarray(raw["bh"], np.float32).reshape(-1)
    bn = np.asarray(raw["bn"], np.float32).reshape(-1)
    cw = np.asarray(raw["cw"], np.float32)            # [T, 5]
    cb = np.asarray(raw["cb"], np.float32).reshape(-1)  # [T]

    T = cw.shape[0]
    Xs, Hin, Nin = wx.shape[0], wh.shape[0], wn.shape[0]
    C3, W6 = 3 * E, 6 * E
    inv = np.argsort(shuffle)                          # xx[:, :, j] = conv[:, :, inv[j]]

    wx_full = np.zeros((Xs, W6), np.float32)
    wh_full = np.zeros((Hin, W6), np.float32)
    wn_full = np.zeros((Nin, W6), np.float32)
    btap = np.zeros((5, E), np.float32)

    wx_full[:, :E] = wx                                # plain xe (gating path)

    for j in range(E):                                 # only channels < E survive
        i_j = inv[j]
        for k in range(5):
            p = i_j + k - 3                            # conv input position (padding=3)
            if 0 <= p < C3:
                col = E + k * E + j
                c = shuffle[p]                         # source channel of xhn
                if c < E:
                    wx_full[:, col] = wx[:, c]
                    btap[k, j] = bx[c]
                elif c < 2 * E:
                    wh_full[:, col] = wh[:, c - E]
                    btap[k, j] = bh[c - E]
                else:
                    wn_full[:, col] = wn[:, c - 2 * E]
                    btap[k, j] = bn[c - 2 * E]

    # Per-time-step tap scales (xe lanes stay 0) and folded conv+embed bias.
    cwm = np.zeros((T, W6), np.float32)
    for k in range(5):
        cwm[:, E + k * E:E + (k + 1) * E] = cw[:, k:k + 1]
    cbias = cb[:, None] + cw @ btap                    # [T, E]

    return {
        "wx_full": jnp.asarray(wx_full),               # [Xs, 6E]
        "wh_full": jnp.asarray(wh_full),               # [Hin, 6E]
        "wn_full": jnp.asarray(wn_full),               # [Nin, 6E]
        "cwm": jnp.asarray(cwm),                       # [T, 6E]
        "cbias": jnp.asarray(cbias),                   # [T, E]
        "bx": jnp.asarray(bx[None, :]),                # [1, E]
    }


def _pick_tiles(rows, T):
    """Row tiling: grid-block rows rt (multiple of strip) and inner strip."""
    cdiv = lambda a, b: -(-a // b)
    base = int(np.lcm(T, 8))
    # Inner strip (~128 rows): bounds the vreg working set (v5e: 1 vst slot).
    strip = max(base, (min(128, max(base, rows // 2)) // base) * base)
    # Grid block (~2048 rows) to amortize per-grid-step overhead; keep >=2
    # blocks whenever possible so both v7x TensorCores get work.
    nblk = cdiv(rows, 2048)
    if nblk == 1 and rows > strip:
        nblk = 2
    rt = cdiv(cdiv(rows, nblk), strip) * strip
    return rt, strip


def eca_forward(x, human, nature, fp):
    """x:[B,T,Xs], human:[B,T,Hin], nature:[B,T,Nin] -> [B,T,E]."""
    B, T, _ = x.shape
    E = fp["bx"].shape[1]
    W6 = 6 * E
    rows = B * T

    # Rows are (b, t) with t fastest -- required by the strip-sized conv
    # constants below; the reshape itself is free (contiguous collapse).
    x2 = x.reshape(rows, x.shape[-1])
    h2 = human.reshape(rows, human.shape[-1])
    n2 = nature.reshape(rows, nature.shape[-1])

    rt, strip = _pick_tiles(rows, T)
    n_strips = rt // strip
    grid_n = -(-rows // rt)
    rows_p = grid_n * rt
    if rows_p != rows:                                 # pad to whole blocks
        pad = rows_p - rows
        x2 = jnp.pad(x2, ((0, pad), (0, 0)))
        h2 = jnp.pad(h2, ((0, pad), (0, 0)))
        n2 = jnp.pad(n2, ((0, pad), (0, 0)))

    # Strip-sized per-time-step conv constants (strip % T == 0 and every block
    # starts at a multiple of T, so strip row i has time step t = i % T).
    reps = strip // T
    cwm_strip = jnp.tile(fp["cwm"], (reps, 1))         # [strip, 6E]
    cbias_strip = jnp.tile(fp["cbias"], (reps, 1))     # [strip, E]

    kernel = functools.partial(eca_kernel, strip=strip, n_strips=n_strips, E=E)
    out = pl.pallas_call(
        kernel,
        out_shape=jax.ShapeDtypeStruct((rows_p, E), jnp.float32),
        grid=(grid_n,),
        in_specs=[
            pl.BlockSpec((rt, x2.shape[1]), lambda i: (i, 0)),
            pl.BlockSpec((rt, h2.shape[1]), lambda i: (i, 0)),
            pl.BlockSpec((rt, n2.shape[1]), lambda i: (i, 0)),
            pl.BlockSpec((x2.shape[1], W6), lambda i: (0, 0)),
            pl.BlockSpec((h2.shape[1], W6), lambda i: (0, 0)),
            pl.BlockSpec((n2.shape[1], W6), lambda i: (0, 0)),
            pl.BlockSpec((strip, W6), lambda i: (0, 0)),
            pl.BlockSpec((strip, E), lambda i: (0, 0)),
            pl.BlockSpec((1, E), lambda i: (0, 0)),
        ],
        out_specs=pl.BlockSpec((rt, E), lambda i: (i, 0)),
        compiler_params=pltpu.CompilerParams(
            dimension_semantics=("parallel",)),
    )(x2, h2, n2, fp["wx_full"], fp["wh_full"], fp["wn_full"],
      cwm_strip, cbias_strip, fp["bx"])

    return out[:rows].reshape(B, T, E)


def eca_reference(x, human, nature, raw, shuffle):
    # Pure-JAX reference mirroring the PyTorch forward (full path).
    xe = x @ raw["wx"] + raw["bx"][0]
    he = human @ raw["wh"] + raw["bh"][0]
    ne = nature @ raw["wn"] + raw["bn"][0]
    xhn = jnp.concatenate([xe, he, ne], axis=-1)          # [B, T, 3E]
    mask = xhn[..., shuffle]                              # Mask[:,:,i] = xhn[:,:,shuffle[i]]
    C3 = mask.shape[-1]
    padded = jnp.pad(mask, ((0, 0), (0, 0), (3, 3)))
    conv = sum(raw["cw"][:, k:k + 1] * padded[:, :, k:k + C3] for k in range(5))
    conv = conv + raw["cb"]
    inv = np.argsort(shuffle)                             # xx[:,:,shuffle[i]] = conv[:,:,i]
    xx = jnp.maximum(conv[..., inv], 0.0)
    E = xe.shape[-1]
    sm = jax.nn.softmax(xx[..., :E], axis=-1)
    return xe * sm


if __name__ == "__main__":
    # Config (all branch flags = 0 -> full path).
    B, T = 2, 8                 # batch, time_step
    Xs = 16                     # input_size
    Hs, Ns = 6, 5               # humansize, naturesize
    E = 32                      # embedding_size
    Hin, Nin = Hs + T, Ns + T
    C3 = 3 * E

    # Deterministic shuffle_list (module uses np.random.shuffle).
    shuffle = np.random.default_rng(0).permutation(C3).astype(np.int32)

    key = jax.random.PRNGKey(0)
    ks = jax.random.split(key, 12)
    raw = {
        "wx": jax.random.normal(ks[0], (Xs, E), jnp.float32) * 0.1,
        "bx": jax.random.normal(ks[1], (1, E), jnp.float32) * 0.1,
        "wh": jax.random.normal(ks[2], (Hin, E), jnp.float32) * 0.1,
        "bh": jax.random.normal(ks[3], (1, E), jnp.float32) * 0.1,
        "wn": jax.random.normal(ks[4], (Nin, E), jnp.float32) * 0.1,
        "bn": jax.random.normal(ks[5], (1, E), jnp.float32) * 0.1,
        "cw": jax.random.normal(ks[6], (T, 5), jnp.float32) * 0.2,   # Conv1d weight [T,1,5] squeezed
        "cb": jax.random.normal(ks[7], (T, 1), jnp.float32) * 0.1,   # Conv1d bias [T]
    }
    # TODO(synk): concat_downsample Linear is only used when static_concat_dynamic==1; not exercised here.

    folded = fold_eca_params(raw, shuffle, E)

    x = jax.random.normal(ks[8], (B, T, Xs), jnp.float32)
    human = jax.random.normal(ks[9], (B, T, Hin), jnp.float32)
    nature = jax.random.normal(ks[10], (B, T, Nin), jnp.float32)

    out = eca_forward(x, human, nature, folded)
    out = jax.block_until_ready(out)

    ref = eca_reference(x, human, nature, raw, shuffle)
    assert out.shape == (B, T, E)
    np.testing.assert_allclose(np.asarray(out), np.asarray(ref), rtol=1e-5, atol=1e-5)

    print("KERNEL_OK")
</pallas_src>

<mosaic_0001>
module attributes {stable_mosaic.version = 11 : i64} {
  func.func @eca_kernel(%arg0: i32, %arg1: memref<8x16xf32, #tpu.memory_space<vmem>>, %arg2: memref<8x14xf32, #tpu.memory_space<vmem>>, %arg3: memref<8x13xf32, #tpu.memory_space<vmem>>, %arg4: memref<16x192xf32, #tpu.memory_space<vmem>>, %arg5: memref<14x192xf32, #tpu.memory_space<vmem>>, %arg6: memref<13x192xf32, #tpu.memory_space<vmem>>, %arg7: memref<8x192xf32, #tpu.memory_space<vmem>>, %arg8: memref<8x32xf32, #tpu.memory_space<vmem>>, %arg9: memref<1x32xf32, #tpu.memory_space<vmem>>, %arg10: memref<8x32xf32, #tpu.memory_space<vmem>>) attributes {dimension_semantics = [#tpu.dimension_semantics<parallel>], iteration_bounds = array<i64: 2>, scalar_prefetch = 0 : i64, scratch_operands = 0 : i64, tpu.core_type = #tpu.core_type<tc>, window_params = [{transform_indices = @transform_0, window_bounds = array<i64: 8, 16>}, {transform_indices = @transform_1, window_bounds = array<i64: 8, 14>}, {transform_indices = @transform_2, window_bounds = array<i64: 8, 13>}, {pipeline_mode = #tpu.pipeline_mode<synchronous>, transform_indices = @transform_3, window_bounds = array<i64: 16, 192>}, {pipeline_mode = #tpu.pipeline_mode<synchronous>, transform_indices = @transform_4, window_bounds = array<i64: 14, 192>}, {pipeline_mode = #tpu.pipeline_mode<synchronous>, transform_indices = @transform_5, window_bounds = array<i64: 13, 192>}, {pipeline_mode = #tpu.pipeline_mode<synchronous>, transform_indices = @transform_6, window_bounds = array<i64: 8, 192>}, {pipeline_mode = #tpu.pipeline_mode<synchronous>, transform_indices = @transform_7, window_bounds = array<i64: 8, 32>}, {pipeline_mode = #tpu.pipeline_mode<synchronous>, transform_indices = @transform_8, window_bounds = array<i64: 1, 32>}, {transform_indices = @transform_9, window_bounds = array<i64: 8, 32>}]} {
    %c0 = arith.constant 0 : index
    %c0_0 = arith.constant 0 : index
    %0 = vector.load %arg1[%c0, %c0_0] : memref<8x16xf32, #tpu.memory_space<vmem>>, vector<8x16xf32>
    %c0_1 = arith.constant 0 : index
    %c0_2 = arith.constant 0 : index
    %1 = vector.load %arg2[%c0_1, %c0_2] : memref<8x14xf32, #tpu.memory_space<vmem>>, vector<8x14xf32>
    %c0_3 = arith.constant 0 : index
    %c0_4 = arith.constant 0 : index
    %2 = vector.load %arg3[%c0_3, %c0_4] : memref<8x13xf32, #tpu.memory_space<vmem>>, vector<8x13xf32>
    %c0_5 = arith.constant 0 : index
    %c0_6 = arith.constant 0 : index
    %3 = vector.load %arg4[%c0_5, %c0_6] : memref<16x192xf32, #tpu.memory_space<vmem>>, vector<16x192xf32>
    %cst = arith.constant dense<0.000000e+00> : vector<8x192xf32>
    %4 = tpu.matmul %0, %3, %cst {dimension_numbers = #tpu.dot_dimension_numbers<[1], [0], [0], [1], [0, 0, 1, 1], [], []>} : vector<8x16xf32>, vector<16x192xf32>, vector<8x192xf32> -> vector<8x192xf32>
    %c0_7 = arith.constant 0 : index
    %c0_8 = arith.constant 0 : index
    %5 = vector.load %arg5[%c0_7, %c0_8] : memref<14x192xf32, #tpu.memory_space<vmem>>, vector<14x192xf32>
    %cst_9 = arith.constant dense<0.000000e+00> : vector<8x192xf32>
    %6 = tpu.matmul %1, %5, %cst_9 {dimension_numbers = #tpu.dot_dimension_numbers<[1], [0], [0], [1], [0, 0, 1, 1], [], []>} : vector<8x14xf32>, vector<14x192xf32>, vector<8x192xf32> -> vector<8x192xf32>
    %7 = arith.addf %4, %6 : vector<8x192xf32>
    %c0_10 = arith.constant 0 : index
    %c0_11 = arith.constant 0 : index
    %8 = vector.load %arg6[%c0_10, %c0_11] : memref<13x192xf32, #tpu.memory_space<vmem>>, vector<13x192xf32>
    %cst_12 = arith.constant dense<0.000000e+00> : vector<8x192xf32>
    %9 = tpu.matmul %2, %8, %cst_12 {dimension_numbers = #tpu.dot_dimension_numbers<[1], [0], [0], [1], [0, 0, 1, 1], [], []>} : vector<8x13xf32>, vector<13x192xf32>, vector<8x192xf32> -> vector<8x192xf32>
    %10 = arith.addf %7, %9 : vector<8x192xf32>
    %11 = vector.extract_strided_slice %10 {offsets = [0, 0], sizes = [8, 32], strides = [1, 1]} : vector<8x192xf32> to vector<8x32xf32>
    %c0_13 = arith.constant 0 : index
    %c0_14 = arith.constant 0 : index
    %12 = vector.load %arg9[%c0_13, %c0_14] : memref<1x32xf32, #tpu.memory_space<vmem>>, vector<1x32xf32>
    %13 = vector.broadcast %12 : vector<1x32xf32> to vector<8x32xf32>
    %14 = arith.addf %11, %13 : vector<8x32xf32>
    %c0_15 = arith.constant 0 : index
    %c0_16 = arith.constant 0 : index
    %15 = vector.load %arg7[%c0_15, %c0_16] : memref<8x192xf32, #tpu.memory_space<vmem>>, vector<8x192xf32>
    %16 = arith.mulf %10, %15 : vector<8x192xf32>
    %17 = vector.extract_strided_slice %16 {offsets = [0, 32], sizes = [8, 32], strides = [1, 1]} : vector<8x192xf32> to vector<8x32xf32>
    %18 = vector.extract_strided_slice %16 {offsets = [0, 64], sizes = [8, 32], strides = [1, 1]} : vector<8x192xf32> to vector<8x32xf32>
    %19 = arith.addf %17, %18 : vector<8x32xf32>
    %20 = vector.extract_strided_slice %16 {offsets = [0, 96], sizes = [8, 32], strides = [1, 1]} : vector<8x192xf32> to vector<8x32xf32>
    %21 = arith.addf %19, %20 : vector<8x32xf32>
    %22 = vector.extract_strided_slice %16 {offsets = [0, 128], sizes = [8, 32], strides = [1, 1]} : vector<8x192xf32> to vector<8x32xf32>
    %23 = arith.addf %21, %22 : vector<8x32xf32>
    %24 = vector.extract_strided_slice %16 {offsets = [0, 160], sizes = [8, 32], strides = [1, 1]} : vector<8x192xf32> to vector<8x32xf32>
    %25 = arith.addf %23, %24 : vector<8x32xf32>
    %c0_17 = arith.constant 0 : index
    %c0_18 = arith.constant 0 : index
    %26 = vector.load %arg8[%c0_17, %c0_18] : memref<8x32xf32, #tpu.memory_space<vmem>>, vector<8x32xf32>
    %27 = arith.addf %25, %26 : vector<8x32xf32>
    %cst_19 = arith.constant 0.000000e+00 : f32
    %28 = vector.broadcast %cst_19 : f32 to vector<8x32xf32>
    %29 = arith.maximumf %27, %28 : vector<8x32xf32>
    %cst_20 = arith.constant dense<0xFF800000> : vector<8xf32>
    %30 = vector.multi_reduction <maximumf>, %29, %cst_20 [1] : vector<8x32xf32> to vector<8xf32>
    %31 = vector.shape_cast %30 : vector<8xf32> to vector<8x1xf32>
    %32 = vector.broadcast %31 : vector<8x1xf32> to vector<8x32xf32>
    %33 = arith.subf %29, %32 : vector<8x32xf32>
    %34 = math.exp %33 : vector<8x32xf32>
    %cst_21 = arith.constant dense<0.000000e+00> : vector<8xf32>
    %35 = vector.multi_reduction <add>, %34, %cst_21 [1] : vector<8x32xf32> to vector<8xf32>
    %36 = vector.shape_cast %35 : vector<8xf32> to vector<8x1xf32>
    %37 = vector.broadcast %36 : vector<8x1xf32> to vector<8x32xf32>
    %38 = arith.divf %34, %37 : vector<8x32xf32>
    %39 = arith.mulf %14, %38 : vector<8x32xf32>
    %c0_22 = arith.constant 0 : index
    %c0_23 = arith.constant 0 : index
    %40 = vector.load %arg10[%c0_22, %c0_23] : memref<8x32xf32, #tpu.memory_space<vmem>>, vector<8x32xf32>
    tpu.vector_store %arg10[%c0_22, %c0_23], %39 {strides = array<i32>} : memref<8x32xf32, #tpu.memory_space<vmem>>, vector<8x32xf32>,
    return
  }
  func.func @transform_0(%arg0: i32) -> (i32, i32) {
    %c0_i32 = arith.constant 0 : i32
    %c0_i32_0 = arith.constant 0 : i32
    return %arg0, %c0_i32 : i32, i32
  }
  func.func @transform_1(%arg0: i32) -> (i32, i32) {
    %c0_i32 = arith.constant 0 : i32
    %c0_i32_0 = arith.constant 0 : i32
    return %arg0, %c0_i32 : i32, i32
  }
  func.func @transform_2(%arg0: i32) -> (i32, i32) {
    %c0_i32 = arith.constant 0 : i32
    %c0_i32_0 = arith.constant 0 : i32
    return %arg0, %c0_i32 : i32, i32
  }
  func.func @transform_3(%arg0: i32) -> (i32, i32) {
    %c0_i32 = arith.constant 0 : i32
    %c0_i32_0 = arith.constant 0 : i32
    %c0_i32_1 = arith.constant 0 : i32
    return %c0_i32, %c0_i32_0 : i32, i32
  }
  func.func @transform_4(%arg0: i32) -> (i32, i32) {
    %c0_i32 = arith.constant 0 : i32
    %c0_i32_0 = arith.constant 0 : i32
    %c0_i32_1 = arith.constant 0 : i32
    return %c0_i32, %c0_i32_0 : i32, i32
  }
  func.func @transform_5(%arg0: i32) -> (i32, i32) {
    %c0_i32 = arith.constant 0 : i32
    %c0_i32_0 = arith.constant 0 : i32
    %c0_i32_1 = arith.constant 0 : i32
    return %c0_i32, %c0_i32_0 : i32, i32
  }
  func.func @transform_6(%arg0: i32) -> (i32, i32) {
    %c0_i32 = arith.constant 0 : i32
    %c0_i32_0 = arith.constant 0 : i32
    %c0_i32_1 = arith.constant 0 : i32
    return %c0_i32, %c0_i32_0 : i32, i32
  }
  func.func @transform_7(%arg0: i32) -> (i32, i32) {
    %c0_i32 = arith.constant 0 : i32
    %c0_i32_0 = arith.constant 0 : i32
    %c0_i32_1 = arith.constant 0 : i32
    return %c0_i32, %c0_i32_0 : i32, i32
  }
  func.func @transform_8(%arg0: i32) -> (i32, i32) {
    %c0_i32 = arith.constant 0 : i32
    %c0_i32_0 = arith.constant 0 : i32
    %c0_i32_1 = arith.constant 0 : i32
    return %c0_i32, %c0_i32_0 : i32, i32
  }
  func.func @transform_9(%arg0: i32) -> (i32, i32) {
    %c0_i32 = arith.constant 0 : i32
    %c0_i32_0 = arith.constant 0 : i32
    return %arg0, %c0_i32 : i32, i32
  }
}

</mosaic_0001>

<llo_original>
// kernel: tpu_custom_call.1
$region0: #{tpu_custom_call.1}
  #allocation0 [shape = 'u32[]', space=smem, size = 0x4, offset = 0x4, fixed_abs, tag = 'smem constant byte address 0x4 - core index']
  #allocation1 [shape = 'u32[144,128]{1,0:T(1,128)}', space=vmem, size = 0x12000, scoped, tag = 'internal scratch']
  %s0 = inlined_call_operand.hbm [shape: f32[16,16], index: 0, kind: input, shape index: {}]
  %s1 = inlined_call_operand.hbm [shape: f32[16,14], index: 1, kind: input, shape index: {}]
  %s2 = inlined_call_operand.hbm [shape: f32[16,13], index: 2, kind: input, shape index: {}]
  %s3 = inlined_call_operand.hbm [shape: f32[16,192], index: 3, kind: input, shape index: {}]
  %s4 = inlined_call_operand.hbm [shape: f32[14,192], index: 4, kind: input, shape index: {}]
  %s5 = inlined_call_operand.hbm [shape: f32[13,192], index: 5, kind: input, shape index: {}]
  %s6 = inlined_call_operand.vmem [shape: f32[8,192], index: 6, kind: input, shape index: {}]
  %s7 = inlined_call_operand.vmem [shape: f32[8,32], index: 7, kind: input, shape index: {}]
  %s8 = inlined_call_operand.vmem [shape: f32[1,32], index: 8, kind: input, shape index: {}]
  %s9 = inlined_call_operand.hbm [shape: f32[16,32], index: 9, kind: output, shape index: {}]
  %s10 = sld [smem:[#allocation0]]
  $region93: #{tpu_custom_call.1} parent=0
    _
  %s12 = ssub.s32 1, %s10
  %s13 = scalar_select 0, %s12, %s10
  $region1: #{tpu_custom_call.1} parent=0
    #allocation2 [shape = 'u8[8192]{0}', space=vmem, size = 0x2000, scoped, tag = 'input window, operand 0']
    #allocation3 [shape = 's32[2]{0}', space=sflag, size = 0x8, scoped, tag = 'scoped memory for tpu_custom_call.1']
    #allocation4 [shape = 's32[2]{0}', space=sflag, size = 0x8, scoped, tag = 'scoped memory for tpu_custom_call.1']
    #allocation5 [shape = 'u8[8192]{0}', space=vmem, size = 0x2000, scoped, tag = 'input window, operand 1']
    #allocation6 [shape = 's32[2]{0}', space=sflag, size = 0x8, scoped, tag = 'scoped memory for tpu_custom_call.1']
    #allocation7 [shape = 'u8[8192]{0}', space=vmem, size = 0x2000, scoped, tag = 'input window, operand 2']
    #allocation8 [shape = 'u8[16384]{0}', space=vmem, size = 0x4000, scoped, tag = 'input window, operand 3, single buffered']
    #allocation9 [shape = 's32[1]{0}', space=sflag, size = 0x4, scoped, tag = 'scoped memory for tpu_custom_call.1']
    #allocation10 [shape = 'u8[16384]{0}', space=vmem, size = 0x4000, scoped, tag = 'input window, operand 4, single buffered']
    #allocation11 [shape = 'u8[16384]{0}', space=vmem, size = 0x4000, scoped, tag = 'input window, operand 5, single buffered']
    #allocation12 [shape = 's32[1]{0}', space=sflag, size = 0x4, scoped, tag = 'scoped memory for tpu_custom_call.1']
    #allocation13 [shape = 'u8[8192]{0}', space=vmem, size = 0x2000, scoped, tag = 'output window, operand 0']
    %14 = vsyncpa [#allocation3], 0
    %s15 = scalar_lea.sflag [#allocation3], 1
    %16 = vsyncpa %s15, 0
    %17 = vsyncpa [#allocation6], 0
    %s18 = scalar_lea.sflag [#allocation6], 1
    %19 = vsyncpa %s18, 0
    %20 = vsyncpa [#allocation9], 0
    %21 = vsyncpa [#allocation12], 0
    %22 = vsyncpa [#allocation4], 0
    %s23 = scalar_lea.sflag [#allocation4], 1
    %24 = vsyncpa %s23, 0
    loop: start=0, step=1, limit=4
    $region2: #{tpu_custom_call.1} parent=1 // loop_pre_header
      _
    $region3: #{tpu_custom_call.1} parent=1 // loop_header
      %s26 = sphi 0, %s30
      %p27 = scmp.ge.s32.totalorder %s26, 4
      %s36 = sphi 0, %s38
      %s39 = sphi 0, %s36
      %s40 = sphi 0, %s39
      %s56 = sphi 0, %s40
      %s62 = sphi 0, %s64
      %s65 = sphi 0, %s62
      %s66 = sphi 0, %s65
      %s82 = sphi 0, %s66
      %s88 = sphi 0, %s90
      %s91 = sphi 0, %s88
      %s92 = sphi 0, %s91
      %s108 = sphi 0, %s92
      %s112 = sphi 0, %s112
      %s114 = sphi 0, %s112
      %s115 = sphi 0, %s114
      %s129 = sphi 0, %s115
      %s133 = sphi 0, %s133
      %s135 = sphi 0, %s133
      %s136 = sphi 0, %s135
      %s150 = sphi 0, %s136
      %s154 = sphi 0, %s154
      %s156 = sphi 0, %s154
      %s157 = sphi 0, %s156
      %s171 = sphi 0, %s157
      %s175 = sphi 0, %s175
      %s177 = sphi 0, %s175
      %s178 = sphi 0, %s177
      %s192 = sphi 0, %s178
      %s196 = sphi 0, %s196
      %s198 = sphi 0, %s196
      %s199 = sphi 0, %s198
      %s213 = sphi 0, %s199
      %s217 = sphi 0, %s217
      %s219 = sphi 0, %s217
      %s220 = sphi 0, %s219
      %s234 = sphi 0, %s220
      %s240 = sphi 0, %s242
      %s243 = sphi 0, %s240
      %s244 = sphi 0, %s243
      %s260 = sphi 0, %s244
    $region4: #{tpu_custom_call.1} parent=1 // loop_header_branch
      %29 = sbr.rel (%p27) target = $region8
    $region5: #{tpu_custom_call.1} parent=1 // loop_body
      %s31 = ssub.s32 %s26, 1
      %s32 = ssub.s32 %s26, 2
      %s33 = sadd.s32 %s26, 1
      %s34 = ssub.s32 %s26, %s33
      %p35 = scmp.eq.s32.totalorder %s34, 0
      %s37 = sadd.s32 %s36, 1
      %s38 = scalar_select %p35, %s36, %s37
      %p41 = pneg %p35
      %p42 = scmp.eq.s32.totalorder %s26, 1
      %p43 = por %p41, %p42
      %p44 = scmp.ne.s32.totalorder %s36, %s39
      %p45 = scmp.eq.s32.totalorder %s26, 0
      %p46 = por %p44, %p45
      %p47 = scmp.ne.s32.totalorder %s36, %s39
      %p48 = scmp.eq.s32.totalorder %s31, 1
      %p49 = por %p47, %p48
      %p50 = scmp.ne.s32.totalorder %s39, %s40
      %p51 = scmp.eq.s32.totalorder %s31, 0
      %p52 = por %p50, %p51
      %p53 = scmp.ne.s32.totalorder %s39, %s40
      %p54 = scmp.eq.s32.totalorder %s32, 1
      %p55 = por %p53, %p54
      %p57 = scmp.ne.s32.totalorder %s40, %s56
      %p58 = scmp.eq.s32.totalorder %s32, 0
      %p59 = por %p57, %p58
      %s60 = ssub.s32 %s26, %s33
      %p61 = scmp.eq.s32.totalorder %s60, 0
      %s63 = sadd.s32 %s62, 1
      %s64 = scalar_select %p61, %s62, %s63
      %p67 = pneg %p61
      %p68 = scmp.eq.s32.totalorder %s26, 1
      %p69 = por %p67, %p68
      %p70 = scmp.ne.s32.totalorder %s62, %s65
      %p71 = scmp.eq.s32.totalorder %s26, 0
      %p72 = por %p70, %p71
      %p73 = scmp.ne.s32.totalorder %s62, %s65
      %p74 = scmp.eq.s32.totalorder %s31, 1
      %p75 = por %p73, %p74
      %p76 = scmp.ne.s32.totalorder %s65, %s66
      %p77 = scmp.eq.s32.totalorder %s31, 0
      %p78 = por %p76, %p77
      %p79 = scmp.ne.s32.totalorder %s65, %s66
      %p80 = scmp.eq.s32.totalorder %s32, 1
      %p81 = por %p79, %p80
      %p83 = scmp.ne.s32.totalorder %s66, %s82
      %p84 = scmp.eq.s32.totalorder %s32, 0
      %p85 = por %p83, %p84
      %s86 = ssub.s32 %s26, %s33
      %p87 = scmp.eq.s32.totalorder %s86, 0
      %s89 = sadd.s32 %s88, 1
      %s90 = scalar_select %p87, %s88, %s89
      %p93 = pneg %p87
      %p94 = scmp.eq.s32.totalorder %s26, 1
      %p95 = por %p93, %p94
      %p96 = scmp.ne.s32.totalorder %s88, %s91
      %p97 = scmp.eq.s32.totalorder %s26, 0
      %p98 = por %p96, %p97
      %p99 = scmp.ne.s32.totalorder %s88, %s91
      %p100 = scmp.eq.s32.totalorder %s31, 1
      %p101 = por %p99, %p100
      %p102 = scmp.ne.s32.totalorder %s91, %s92
      %p103 = scmp.eq.s32.totalorder %s31, 0
      %p104 = por %p102, %p103
      %p105 = scmp.ne.s32.totalorder %s91, %s92
      %p106 = scmp.eq.s32.totalorder %s32, 1
      %p107 = por %p105, %p106
      %p109 = scmp.ne.s32.totalorder %s92, %s108
      %p110 = scmp.eq.s32.totalorder %s32, 0
      %p111 = por %p109, %p110
      %s113 = sadd.s32 %s112, 1
      %p116 = scmp.eq.s32.totalorder %s26, 1
      %p117 = scmp.ne.s32.totalorder %s112, %s114
      %p118 = scmp.eq.s32.totalorder %s26, 0
      %p119 = por %p117, %p118
      %p120 = scmp.ne.s32.totalorder %s112, %s114
      %p121 = scmp.eq.s32.totalorder %s31, 1
      %p122 = por %p120, %p121
      %p123 = scmp.ne.s32.totalorder %s114, %s115
      %p124 = scmp.eq.s32.totalorder %s31, 0
      %p125 = por %p123, %p124
      %p126 = scmp.ne.s32.totalorder %s114, %s115
      %p127 = scmp.eq.s32.totalorder %s32, 1
      %p128 = por %p126, %p127
      %p130 = scmp.ne.s32.totalorder %s115, %s129
      %p131 = scmp.eq.s32.totalorder %s32, 0
      %p132 = por %p130, %p131
      %s134 = sadd.s32 %s133, 1
      %p137 = scmp.eq.s32.totalorder %s26, 1
      %p138 = scmp.ne.s32.totalorder %s133, %s135
      %p139 = scmp.eq.s32.totalorder %s26, 0
      %p140 = por %p138, %p139
      %p141 = scmp.ne.s32.totalorder %s133, %s135
      %p142 = scmp.eq.s32.totalorder %s31, 1
      %p143 = por %p141, %p142
      %p144 = scmp.ne.s32.totalorder %s135, %s136
      %p145 = scmp.eq.s32.totalorder %s31, 0
      %p146 = por %p144, %p145
      %p147 = scmp.ne.s32.totalorder %s135, %s136
      %p148 = scmp.eq.s32.totalorder %s32, 1
      %p149 = por %p147, %p148
      %p151 = scmp.ne.s32.totalorder %s136, %s150
      %p152 = scmp.eq.s32.totalorder %s32, 0
      %p153 = por %p151, %p152
      %s155 = sadd.s32 %s154, 1
      %p158 = scmp.eq.s32.totalorder %s26, 1
      %p159 = scmp.ne.s32.totalorder %s154, %s156
      %p160 = scmp.eq.s32.totalorder %s26, 0
      %p161 = por %p159, %p160
      %p162 = scmp.ne.s32.totalorder %s154, %s156
      %p163 = scmp.eq.s32.totalorder %s31, 1
      %p164 = por %p162, %p163
      %p165 = scmp.ne.s32.totalorder %s156, %s157
      %p166 = scmp.eq.s32.totalorder %s31, 0
      %p167 = por %p165, %p166
      %p168 = scmp.ne.s32.totalorder %s156, %s157
      %p169 = scmp.eq.s32.totalorder %s32, 1
      %p170 = por %p168, %p169
      %p172 = scmp.ne.s32.totalorder %s157, %s171
      %p173 = scmp.eq.s32.totalorder %s32, 0
      %p174 = por %p172, %p173
      %s176 = sadd.s32 %s175, 1
      %p179 = scmp.eq.s32.totalorder %s26, 1
      %p180 = scmp.ne.s32.totalorder %s175, %s177
      %p181 = scmp.eq.s32.totalorder %s26, 0
      %p182 = por %p180, %p181
      %p183 = scmp.ne.s32.totalorder %s175, %s177
      %p184 = scmp.eq.s32.totalorder %s31, 1
      %p185 = por %p183, %p184
      %p186 = scmp.ne.s32.totalorder %s177, %s178
      %p187 = scmp.eq.s32.totalorder %s31, 0
      %p188 = por %p186, %p187
      %p189 = scmp.ne.s32.totalorder %s177, %s178
      %p190 = scmp.eq.s32.totalorder %s32, 1
      %p191 = por %p189, %p190
      %p193 = scmp.ne.s32.totalorder %s178, %s192
      %p194 = scmp.eq.s32.totalorder %s32, 0
      %p195 = por %p193, %p194
      %s197 = sadd.s32 %s196, 1
      %p200 = scmp.eq.s32.totalorder %s26, 1
      %p201 = scmp.ne.s32.totalorder %s196, %s198
      %p202 = scmp.eq.s32.totalorder %s26, 0
      %p203 = por %p201, %p202
      %p204 = scmp.ne.s32.totalorder %s196, %s198
      %p205 = scmp.eq.s32.totalorder %s31, 1
      %p206 = por %p204, %p205
      %p207 = scmp.ne.s32.totalorder %s198, %s199
      %p208 = scmp.eq.s32.totalorder %s31, 0
      %p209 = por %p207, %p208
      %p210 = scmp.ne.s32.totalorder %s198, %s199
      %p211 = scmp.eq.s32.totalorder %s32, 1
      %p212 = por %p210, %p211
      %p214 = scmp.ne.s32.totalorder %s199, %s213
      %p215 = scmp.eq.s32.totalorder %s32, 0
      %p216 = por %p214, %p215
      %s218 = sadd.s32 %s217, 1
      %p221 = scmp.eq.s32.totalorder %s26, 1
      %p222 = scmp.ne.s32.totalorder %s217, %s219
      %p223 = scmp.eq.s32.totalorder %s26, 0
      %p224 = por %p222, %p223
      %p225 = scmp.ne.s32.totalorder %s217, %s219
      %p226 = scmp.eq.s32.totalorder %s31, 1
      %p227 = por %p225, %p226
      %p228 = scmp.ne.s32.totalorder %s219, %s220
      %p229 = scmp.eq.s32.totalorder %s31, 0
      %p230 = por %p228, %p229
      %p231 = scmp.ne.s32.totalorder %s219, %s220
      %p232 = scmp.eq.s32.totalorder %s32, 1
      %p233 = por %p231, %p232
      %p235 = scmp.ne.s32.totalorder %s220, %s234
      %p236 = scmp.eq.s32.totalorder %s32, 0
      %p237 = por %p235, %p236
      %s238 = ssub.s32 %s26, %s33
      %p239 = scmp.eq.s32.totalorder %s238, 0
      %s241 = sadd.s32 %s240, 1
      %s242 = scalar_select %p239, %s240, %s241
      %p245 = pneg %p239
      %p246 = scmp.eq.s32.totalorder %s26, 1
      %p247 = por %p245, %p246
      %p248 = scmp.ne.s32.totalorder %s240, %s243
      %p249 = scmp.eq.s32.totalorder %s26, 0
      %p250 = por %p248, %p249
      %p251 = scmp.ne.s32.totalorder %s240, %s243
      %p252 = scmp.eq.s32.totalorder %s31, 1
      %p253 = por %p251, %p252
      %p254 = scmp.ne.s32.totalorder %s243, %s244
      %p255 = scmp.eq.s32.totalorder %s31, 0
      %p256 = por %p254, %p255
      %p257 = scmp.ne.s32.totalorder %s243, %s244
      %p258 = scmp.eq.s32.totalorder %s32, 1
      %p259 = por %p257, %p258
      %p261 = scmp.ne.s32.totalorder %s244, %s260
      %p262 = scmp.eq.s32.totalorder %s32, 0
      %p263 = por %p261, %p262
      %p264 = scmp.le.s32.totalorder 1, %s26
      %p265 = scmp.lt.s32.totalorder %s26, 3
      %p266 = pnand %p264, %p265
      %p267 = pneg %p266
      // Predicated region
      $region9: #{tpu_custom_call.1} parent=5 // pred_check
        _
      $region10: #{tpu_custom_call.1} parent=5 // pred_check_branch
        %269 = sbr.rel (%p266) target = $region12
      $region11: #{tpu_custom_call.1} parent=5 // pred_region
        %s270 = ssub.s32 %s26, 1
        // Predicated region
        $region13: #{tpu_custom_call.1} parent=11 // pred_check
          %p271 = pneg %p125
        $region14: #{tpu_custom_call.1} parent=11 // pred_check_branch
          %273 = sbr.rel (%p271) target = $region16
        $region15: #{tpu_custom_call.1} parent=11 // pred_region
          %s275 = ssub.s32 512, 512
          %276 = vsyncadd [#allocation9], %s275
          %s277 = sshll.u32 [#allocation8], 4
          %s278 = int_to_ptr.vmem [resolvable:$true] %s277
          %283 = dma.hbm_to_vmem [thread:$0]  %s3, 512, %s278, [#allocation9], 256, 256, 16
        $region16: #{tpu_custom_call.1} parent=11 // pred_fallthru
          _
        // Predicated region
        $region17: #{tpu_custom_call.1} parent=11 // pred_check
          %p284 = pneg %p146
        $region18: #{tpu_custom_call.1} parent=11 // pred_check_branch
          %286 = sbr.rel (%p284) target = $region20
        $region19: #{tpu_custom_call.1} parent=11 // pred_region
          %s288 = ssub.s32 512, 512
          %289 = vsyncadd [#allocation9], %s288
          %s290 = sshll.u32 [#allocation10], 4
          %s291 = int_to_ptr.vmem [resolvable:$true] %s290
          %296 = dma.hbm_to_vmem [thread:$0]  %s4, 512, %s291, [#allocation9], 256, 256, 16
        $region20: #{tpu_custom_call.1} parent=11 // pred_fallthru
          _
        // Predicated region
        $region21: #{tpu_custom_call.1} parent=11 // pred_check
          %p297 = pneg %p167
        $region22: #{tpu_custom_call.1} parent=11 // pred_check_branch
          %299 = sbr.rel (%p297) target = $region24
        $region23: #{tpu_custom_call.1} parent=11 // pred_region
          %s301 = ssub.s32 512, 512
          %302 = vsyncadd [#allocation12], %s301
          %s303 = sshll.u32 [#allocation11], 4
          %s304 = int_to_ptr.vmem [resolvable:$true] %s303
          %309 = dma.hbm_to_vmem [thread:$0]  %s5, 512, %s304, [#allocation12], 256, 256, 16
        $region24: #{tpu_custom_call.1} parent=11 // pred_fallthru
          _
        // Predicated region
        $region25: #{tpu_custom_call.1} parent=11 // pred_check
          %p310 = pneg %p188
        $region26: #{tpu_custom_call.1} parent=11 // pred_check_branch
          %312 = sbr.rel (%p310) target = $region28
        $region27: #{tpu_custom_call.1} parent=11 // pred_region
          _
        $region28: #{tpu_custom_call.1} parent=11 // pred_fallthru
          _
        // Predicated region
        $region29: #{tpu_custom_call.1} parent=11 // pred_check
          %p313 = pneg %p209
        $region30: #{tpu_custom_call.1} parent=11 // pred_check_branch
          %315 = sbr.rel (%p313) target = $region32
        $region31: #{tpu_custom_call.1} parent=11 // pred_region
          _
        $region32: #{tpu_custom_call.1} parent=11 // pred_fallthru
          _
        // Predicated region
        $region33: #{tpu_custom_call.1} parent=11 // pred_check
          %p316 = pneg %p230
        $region34: #{tpu_custom_call.1} parent=11 // pred_check_branch
          %318 = sbr.rel (%p316) target = $region36
        $region35: #{tpu_custom_call.1} parent=11 // pred_region
          _
        $region36: #{tpu_custom_call.1} parent=11 // pred_fallthru
          _
      $region12: #{tpu_custom_call.1} parent=5 // pred_fallthru
        _
      %p319 = scmp.lt.s32.totalorder %s26, 2
      // Predicated region
      $region37: #{tpu_custom_call.1} parent=5 // pred_check
        %p320 = pneg %p319
      $region38: #{tpu_custom_call.1} parent=5 // pred_check_branch
        %322 = sbr.rel (%p320) target = $region40
      $region39: #{tpu_custom_call.1} parent=5 // pred_region
        // Predicated region
        $region41: #{tpu_custom_call.1} parent=39 // pred_check
          %p323 = pneg %p46
        $region42: #{tpu_custom_call.1} parent=39 // pred_check_branch
          %325 = sbr.rel (%p323) target = $region44
        $region43: #{tpu_custom_call.1} parent=39 // pred_region
          %s326 = sand.u32 %s36, 1
          %s327 = scalar_lea.sflag [#allocation3], %s326
          %s328 = sand.u32 %s36, 1
          %s329 = smul.addr %s328, 8
          %s330 = scalar_lea.vmem [#allocation2], %s329
          %s332 = ssub.s32 128, 128
          %333 = vsyncadd %s327, %s332
          %s334 = smul.addr %s26, 128
          %s335 = scalar_lea.hbm %s0, %s334
          %s337 = sshll.u32 %s330, 4
          %s338 = int_to_ptr.vmem [resolvable:$true] %s337
          %340 = dma.hbm_to_vmem [thread:$0]  %s335, 128, %s338, %s327
        $region44: #{tpu_custom_call.1} parent=39 // pred_fallthru
          _
        // Predicated region
        $region45: #{tpu_custom_call.1} parent=39 // pred_check
          %p341 = pneg %p72
        $region46: #{tpu_custom_call.1} parent=39 // pred_check_branch
          %343 = sbr.rel (%p341) target = $region48
        $region47: #{tpu_custom_call.1} parent=39 // pred_region
          %s344 = sand.u32 %s26, 1
          %s345 = scalar_lea.sflag [#allocation6], %s344
          %s346 = sand.u32 %s62, 1
          %s347 = smul.addr %s346, 8
          %s348 = scalar_lea.vmem [#allocation5], %s347
          %s350 = ssub.s32 128, 128
          %351 = vsyncadd %s345, %s350
          %s352 = smul.addr %s26, 128
          %s353 = scalar_lea.hbm %s1, %s352
          %s355 = sshll.u32 %s348, 4
          %s356 = int_to_ptr.vmem [resolvable:$true] %s355
          %358 = dma.hbm_to_vmem [thread:$0]  %s353, 128, %s356, %s345
        $region48: #{tpu_custom_call.1} parent=39 // pred_fallthru
          _
        // Predicated region
        $region49: #{tpu_custom_call.1} parent=39 // pred_check
          %p359 = pneg %p98
        $region50: #{tpu_custom_call.1} parent=39 // pred_check_branch
          %361 = sbr.rel (%p359) target = $region52
        $region51: #{tpu_custom_call.1} parent=39 // pred_region
          %s362 = sand.u32 %s26, 1
          %s363 = scalar_lea.sflag [#allocation6], %s362
          %s364 = sand.u32 %s88, 1
          %s365 = smul.addr %s364, 8
          %s366 = scalar_lea.vmem [#allocation7], %s365
          %s368 = ssub.s32 128, 128
          %369 = vsyncadd %s363, %s368
          %s370 = smul.addr %s26, 128
          %s371 = scalar_lea.hbm %s2, %s370
          %s373 = sshll.u32 %s366, 4
          %s374 = int_to_ptr.vmem [resolvable:$true] %s373
          %376 = dma.hbm_to_vmem [thread:$0]  %s371, 128, %s374, %s363
        $region52: #{tpu_custom_call.1} parent=39 // pred_fallthru
          _
      $region40: #{tpu_custom_call.1} parent=5 // pred_fallthru
        _
      %p377 = scmp.le.s32.totalorder 1, %s26
      %p378 = scmp.lt.s32.totalorder %s26, 3
      %p379 = pnand %p377, %p378
      %p380 = pneg %p379
      // Predicated region
      $region53: #{tpu_custom_call.1} parent=5 // pred_check
        _
      $region54: #{tpu_custom_call.1} parent=5 // pred_check_branch
        %382 = sbr.rel (%p379) target = $region56
      $region55: #{tpu_custom_call.1} parent=5 // pred_region
        %s383 = ssub.s32 %s26, 1
        %s384 = sand.u32 %s39, 1
        %s385 = scalar_lea.sflag [#allocation3], %s384
        %s386 = sand.u32 %s39, 1
        %s387 = smul.addr %s386, 8
        %s388 = scalar_lea.vmem [#allocation2], %s387
        // Predicated region
        $region57: #{tpu_custom_call.1} parent=55 // pred_check
          %p389 = pneg %p52
        $region58: #{tpu_custom_call.1} parent=55 // pred_check_branch
          %391 = sbr.rel (%p389) target = $region60
        $region59: #{tpu_custom_call.1} parent=55 // pred_region
          %392 = dma.done %s385, 128
        $region60: #{tpu_custom_call.1} parent=55 // pred_fallthru
          _
        %s393 = sand.u32 %s31, 1
        %s394 = scalar_lea.sflag [#allocation6], %s393
        %s395 = sand.u32 %s65, 1
        %s396 = smul.addr %s395, 8
        %s397 = scalar_lea.vmem [#allocation5], %s396
        // Predicated region
        $region61: #{tpu_custom_call.1} parent=55 // pred_check
          %p398 = pneg %p78
        $region62: #{tpu_custom_call.1} parent=55 // pred_check_branch
          %400 = sbr.rel (%p398) target = $region64
        $region63: #{tpu_custom_call.1} parent=55 // pred_region
          %401 = dma.done %s394, 128
        $region64: #{tpu_custom_call.1} parent=55 // pred_fallthru
          _
        %s402 = sand.u32 %s31, 1
        %s403 = scalar_lea.sflag [#allocation6], %s402
        %s404 = sand.u32 %s91, 1
        %s405 = smul.addr %s404, 8
        %s406 = scalar_lea.vmem [#allocation7], %s405
        // Predicated region
        $region65: #{tpu_custom_call.1} parent=55 // pred_check
          %p407 = pneg %p104
        $region66: #{tpu_custom_call.1} parent=55 // pred_check_branch
          %409 = sbr.rel (%p407) target = $region68
        $region67: #{tpu_custom_call.1} parent=55 // pred_region
          %410 = dma.done %s403, 128
        $region68: #{tpu_custom_call.1} parent=55 // pred_fallthru
          _
        // Predicated region
        $region69: #{tpu_custom_call.1} parent=55 // pred_check
          %p411 = pneg %p125
        $region70: #{tpu_custom_call.1} parent=55 // pred_check_branch
          %413 = sbr.rel (%p411) target = $region72
        $region71: #{tpu_custom_call.1} parent=55 // pred_region
          %414 = dma.done [#allocation9], 512
        $region72: #{tpu_custom_call.1} parent=55 // pred_fallthru
          _
        // Predicated region
        $region73: #{tpu_custom_call.1} parent=55 // pred_check
          %p415 = pneg %p146
        $region74: #{tpu_custom_call.1} parent=55 // pred_check_branch
          %417 = sbr.rel (%p415) target = $region76
        $region75: #{tpu_custom_call.1} parent=55 // pred_region
          %418 = dma.done [#allocation9], 512
        $region76: #{tpu_custom_call.1} parent=55 // pred_fallthru
          _
        // Predicated region
        $region77: #{tpu_custom_call.1} parent=55 // pred_check
          %p419 = pneg %p167
        $region78: #{tpu_custom_call.1} parent=55 // pred_check_branch
          %421 = sbr.rel (%p419) target = $region80
        $region79: #{tpu_custom_call.1} parent=55 // pred_region
          %422 = dma.done [#allocation12], 512
        $region80: #{tpu_custom_call.1} parent=55 // pred_fallthru
          _
        %s423 = sand.u32 %s39, 1
        %s424 = scalar_lea.sflag [#allocation3], %s423
        %s425 = sand.u32 %s39, 1
        %s426 = smul.addr %s425, 8
        %s427 = scalar_lea.vmem [#allocation2], %s426
        %p428 = pneg %p52
        %p429 = pneg %p49
        %s430 = sand.u32 %s31, 1
        %s431 = scalar_lea.sflag [#allocation6], %s430
        %s432 = sand.u32 %s65, 1
        %s433 = smul.addr %s432, 8
        %s434 = scalar_lea.vmem [#allocation5], %s433
        %p435 = pneg %p78
        %p436 = pneg %p75
        %s437 = sand.u32 %s31, 1
        %s438 = scalar_lea.sflag [#allocation6], %s437
        %s439 = sand.u32 %s91, 1
        %s440 = smul.addr %s439, 8
        %s441 = scalar_lea.vmem [#allocation7], %s440
        %p442 = pneg %p104
        %p443 = pneg %p101
        %p444 = pneg %p125
        %p445 = pneg %p122
        %p446 = pneg %p146
        %p447 = pneg %p143
        %p448 = pneg %p167
        %p449 = pneg %p164
        %p450 = pneg %p188
        %p451 = pneg %p185
        %p452 = pneg %p209
        %p453 = pneg %p206
        %p454 = pneg %p230
        %p455 = pneg %p227
        %p456 = pneg %p256
        %p457 = pneg %p253
        %s458 = sand.u32 %s243, 1
        %s459 = scalar_lea.sflag [#allocation4], %s458
        %s460 = sand.u32 %s243, 1
        %s461 = smul.addr %s460, 8
        %s462 = scalar_lea.vmem [#allocation13], %s461
        %v463 = vld [vmem:[%s388] sm:$0xff]
        %v464 = vld [vmem:[%s397] sm:$0xff]
        %v465 = vld [vmem:[%s406] sm:$0xff]
        %v466 = vld [vmem:[#allocation8] sm:$0xff]
        %v467 = vld [vmem:[#allocation8 + $0x8] sm:$0xff]
        %v468 = vld [vmem:[#allocation8 + $0x10] sm:$0xff]
        %v469 = vld [vmem:[#allocation8 + $0x18] sm:$0xff]
        %v470 = vld [vmem:[#allocation10] sm:$0xff]
        %v471 = vld [vmem:[#allocation10 + $0x8] sm:$0xff]
        %v472 = vld [vmem:[#allocation10 + $0x10] sm:$0x3f]
        %v473 = vld [vmem:[#allocation10 + $0x18] sm:$0x3f]
        %vm474 = vcmask 113664
        %v476 = vsel %vm474, %v464, 0
        %vm478 = vcmask 1045504
        %v480 = vsel %vm478, %v472, 0
        %v483 = vsel %vm478, %v473, 0
        %485 = vmatprep.subr.mxu0 %v471
        %486 = vmatpush1.msra.mxu0 %v470
        %487 = vmatprep.subr.mxu0 %v483
        %488 = vmatpush1.msra.mxu0 %v480
        %489 = vmatprep.subr.mxu0 0.0
        %490 = vmatpush1.msra.mxu0 0.0
        %491 = vmatprep.subr.mxu0 0.0
        %492 = vmatpush1.msra.mxu0 0.0
        %493 = vmatprep.subr.mxu0 0.0
        %494 = vmatpush1.msra.mxu0 0.0
        %495 = vmatprep.subr.mxu0 0.0
        %496 = vmatpush1.msra.mxu0 0.0
        %497 = vmatprep.subr.mxu0 0.0
        %498 = vmatpush1.msra.mxu0 0.0
        %499 = vmatprep.subr.mxu0 0.0
        %500 = vmatpush1.msra.mxu0 0.0
        %501 = vmatprep.subr.mxu0 0.0
        %502 = vmatpush1.msra.mxu0 0.0
        %503 = vmatprep.subr.mxu0 0.0
        %504 = vmatpush1.msra.mxu0 0.0
        %505 = vmatprep.subr.mxu0 0.0
        %506 = vmatpush1.msra.mxu0 0.0
        %507 = vmatprep.subr.mxu0 0.0
        %508 = vmatpush1.msra.mxu0 0.0
        %509 = vmatprep.subr.mxu0 0.0
        %510 = vmatpush1.msra.mxu0 0.0
        %511 = vmatprep.subr.mxu0 0.0
        %512 = vmatpush1.msra.mxu0 0.0
        %513 = vmatprep.subr.mxu0 0.0
        %514 = vmatpush1.msra.mxu0 0.0
        %515 = vmatprep.subr.mxu0 0.0
        %516 = vmatpush1.msra.mxu0 0.0
        %517 = vmatprep.subr.mxu0 0.0
        %518 = vmatpush1.msra.mxu0 0.0
        %519 = vmatprep.subr.mxu0 0.0
        %520 = vmatpush1.msra.mxu0 0.0
        %521 = vmatprep.subr.mxu0 0.0
        %522 = vmatpush1.msra.mxu0 0.0
        %523 = vmatprep.subr.mxu0 0.0
        %524 = vmatpush1.msra.mxu0 0.0
        %525 = vmatprep.subr.mxu0 0.0
        %526 = vmatpush1.msra.mxu0 0.0
        %527 = vmatprep.subr.mxu0 0.0
        %528 = vmatpush1.msra.mxu0 0.0
        %529 = vmatprep.subr.mxu0 0.0
        %530 = vmatpush1.msra.mxu0 0.0
        %531 = vmatprep.subr.mxu0 0.0
        %532 = vmatpush1.msra.mxu0 0.0
        %533 = vmatprep.subr.mxu0 0.0
        %534 = vmatpush1.msra.mxu0 0.0
        %535 = vmatprep.subr.mxu0 0.0
        %536 = vmatpush1.msra.mxu0 0.0
        %537 = vmatprep.subr.mxu0 0.0
        %538 = vmatpush1.msra.mxu0 0.0
        %539 = vmatprep.subr.mxu0 0.0
        %540 = vmatpush1.msra.mxu0 0.0
        %541 = vmatprep.subr.mxu0 0.0
        %542 = vmatpush1.msra.mxu0 0.0
        %543 = vmatprep.subr.mxu0 0.0
        %544 = vmatpush1.msra.mxu0 0.0
        %545 = vmatprep.subr.mxu0 0.0
        %546 = vmatpush1.msra.mxu0 0.0
        %547 = vmatprep.subr.mxu0 0.0
        %548 = vmatpush1.msra.mxu0 0.0
        %549 = vmatprep.mubr.f32.mxu0 0.0
        %550 = vmatmul.mubr.f32.gmra.mrb[0].mxu0 %v476
        %v551 = vpop.f32.mrb[0].mxu0
        %v552 = vadd.f32 0.0, %v551
        %v553 = vpop.f32.mrb[0].mxu0
        %v554 = vadd.f32 0.0, %v553
        %555 = vdwg.mxu0
        %vm556 = vcmask 130048
        %v558 = vsel %vm556, %v463, 0
        %560 = vmatprep.subr.mxu0 %v467
        %561 = vmatpush1.msra.mxu0 %v466
        %562 = vmatprep.subr.mxu0 %v469
        %563 = vmatpush1.msra.mxu0 %v468
        %564 = vmatprep.subr.mxu0 0.0
        %565 = vmatpush1.msra.mxu0 0.0
        %566 = vmatprep.subr.mxu0 0.0
        %567 = vmatpush1.msra.mxu0 0.0
        %568 = vmatprep.subr.mxu0 0.0
        %569 = vmatpush1.msra.mxu0 0.0
        %570 = vmatprep.subr.mxu0 0.0
        %571 = vmatpush1.msra.mxu0 0.0
        %572 = vmatprep.subr.mxu0 0.0
        %573 = vmatpush1.msra.mxu0 0.0
        %574 = vmatprep.subr.mxu0 0.0
        %575 = vmatpush1.msra.mxu0 0.0
        %576 = vmatprep.subr.mxu0 0.0
        %577 = vmatpush1.msra.mxu0 0.0
        %578 = vmatprep.subr.mxu0 0.0
        %579 = vmatpush1.msra.mxu0 0.0
        %580 = vmatprep.subr.mxu0 0.0
        %581 = vmatpush1.msra.mxu0 0.0
        %582 = vmatprep.subr.mxu0 0.0
        %583 = vmatpush1.msra.mxu0 0.0
        %584 = vmatprep.subr.mxu0 0.0
        %585 = vmatpush1.msra.mxu0 0.0
        %586 = vmatprep.subr.mxu0 0.0
        %587 = vmatpush1.msra.mxu0 0.0
        %588 = vmatprep.subr.mxu0 0.0
        %589 = vmatpush1.msra.mxu0 0.0
        %590 = vmatprep.subr.mxu0 0.0
        %591 = vmatpush1.msra.mxu0 0.0
        %592 = vmatprep.subr.mxu0 0.0
        %593 = vmatpush1.msra.mxu0 0.0
        %594 = vmatprep.subr.mxu0 0.0
        %595 = vmatpush1.msra.mxu0 0.0
        %596 = vmatprep.subr.mxu0 0.0
        %597 = vmatpush1.msra.mxu0 0.0
        %598 = vmatprep.subr.mxu0 0.0
        %599 = vmatpush1.msra.mxu0 0.0
        %600 = vmatprep.subr.mxu0 0.0
        %601 = vmatpush1.msra.mxu0 0.0
        %602 = vmatprep.subr.mxu0 0.0
        %603 = vmatpush1.msra.mxu0 0.0
        %604 = vmatprep.subr.mxu0 0.0
        %605 = vmatpush1.msra.mxu0 0.0
        %606 = vmatprep.subr.mxu0 0.0
        %607 = vmatpush1.msra.mxu0 0.0
        %608 = vmatprep.subr.mxu0 0.0
        %609 = vmatpush1.msra.mxu0 0.0
        %610 = vmatprep.subr.mxu0 0.0
        %611 = vmatpush1.msra.mxu0 0.0
        %612 = vmatprep.subr.mxu0 0.0
        %613 = vmatpush1.msra.mxu0 0.0
        %614 = vmatprep.subr.mxu0 0.0
        %615 = vmatpush1.msra.mxu0 0.0
        %616 = vmatprep.subr.mxu0 0.0
        %617 = vmatpush1.msra.mxu0 0.0
        %618 = vmatprep.subr.mxu0 0.0
        %619 = vmatpush1.msra.mxu0 0.0
        %620 = vmatprep.subr.mxu0 0.0
        %621 = vmatpush1.msra.mxu0 0.0
        %622 = vmatprep.subr.mxu0 0.0
        %623 = vmatpush1.msra.mxu0 0.0
        %624 = vmatprep.mubr.f32.mxu0 0.0
        %625 = vmatmul.mubr.f32.gmra.mrb[0].mxu0 %v558
        %v626 = vpop.f32.mrb[0].mxu0
        %v627 = vadd.f32 %v552, %v626
        %v628 = vpop.f32.mrb[0].mxu0
        %v629 = vadd.f32 %v554, %v628
        %630 = vdwg.mxu0
        %v631 = vld [vmem:[#allocation11] sm:$0xff]
        %v632 = vld [vmem:[#allocation11 + $0x8] sm:$0xff]
        %v633 = vld [vmem:[#allocation11 + $0x10] sm:$0x1f]
        %v634 = vld [vmem:[#allocation11 + $0x18] sm:$0x1f]
        %vm635 = vcmask 105472
        %v637 = vsel %vm635, %v465, 0
        %vm639 = vcmask 1044480
        %v641 = vsel %vm639, %v633, 0
        %v644 = vsel %vm639, %v634, 0
        %646 = vmatprep.subr.mxu0 %v632
        %647 = vmatpush1.msra.mxu0 %v631
        %648 = vmatprep.subr.mxu0 %v644
        %649 = vmatpush1.msra.mxu0 %v641
        %650 = vmatprep.subr.mxu0 0.0
        %651 = vmatpush1.msra.mxu0 0.0
        %652 = vmatprep.subr.mxu0 0.0
        %653 = vmatpush1.msra.mxu0 0.0
        %654 = vmatprep.subr.mxu0 0.0
        %655 = vmatpush1.msra.mxu0 0.0
        %656 = vmatprep.subr.mxu0 0.0
        %657 = vmatpush1.msra.mxu0 0.0
        %658 = vmatprep.subr.mxu0 0.0
        %659 = vmatpush1.msra.mxu0 0.0
        %660 = vmatprep.subr.mxu0 0.0
        %661 = vmatpush1.msra.mxu0 0.0
        %662 = vmatprep.subr.mxu0 0.0
        %663 = vmatpush1.msra.mxu0 0.0
        %664 = vmatprep.subr.mxu0 0.0
        %665 = vmatpush1.msra.mxu0 0.0
        %666 = vmatprep.subr.mxu0 0.0
        %667 = vmatpush1.msra.mxu0 0.0
        %668 = vmatprep.subr.mxu0 0.0
        %669 = vmatpush1.msra.mxu0 0.0
        %670 = vmatprep.subr.mxu0 0.0
        %671 = vmatpush1.msra.mxu0 0.0
        %672 = vmatprep.subr.mxu0 0.0
        %673 = vmatpush1.msra.mxu0 0.0
        %674 = vmatprep.subr.mxu0 0.0
        %675 = vmatpush1.msra.mxu0 0.0
        %676 = vmatprep.subr.mxu0 0.0
        %677 = vmatpush1.msra.mxu0 0.0
        %678 = vmatprep.subr.mxu0 0.0
        %679 = vmatpush1.msra.mxu0 0.0
        %680 = vmatprep.subr.mxu0 0.0
        %681 = vmatpush1.msra.mxu0 0.0
        %682 = vmatprep.subr.mxu0 0.0
        %683 = vmatpush1.msra.mxu0 0.0
        %684 = vmatprep.subr.mxu0 0.0
        %685 = vmatpush1.msra.mxu0 0.0
        %686 = vmatprep.subr.mxu0 0.0
        %687 = vmatpush1.msra.mxu0 0.0
        %688 = vmatprep.subr.mxu0 0.0
        %689 = vmatpush1.msra.mxu0 0.0
        %690 = vmatprep.subr.mxu0 0.0
        %691 = vmatpush1.msra.mxu0 0.0
        %692 = vmatprep.subr.mxu0 0.0
        %693 = vmatpush1.msra.mxu0 0.0
        %694 = vmatprep.subr.mxu0 0.0
        %695 = vmatpush1.msra.mxu0 0.0
        %696 = vmatprep.subr.mxu0 0.0
        %697 = vmatpush1.msra.mxu0 0.0
        %698 = vmatprep.subr.mxu0 0.0
        %699 = vmatpush1.msra.mxu0 0.0
        %700 = vmatprep.subr.mxu0 0.0
        %701 = vmatpush1.msra.mxu0 0.0
        %702 = vmatprep.subr.mxu0 0.0
        %703 = vmatpush1.msra.mxu0 0.0
        %704 = vmatprep.subr.mxu0 0.0
        %705 = vmatpush1.msra.mxu0 0.0
        %706 = vmatprep.subr.mxu0 0.0
        %707 = vmatpush1.msra.mxu0 0.0
        %708 = vmatprep.subr.mxu0 0.0
        %709 = vmatpush1.msra.mxu0 0.0
        %710 = vmatprep.mubr.f32.mxu0 0.0
        %711 = vmatmul.mubr.f32.gmra.mrb[0].mxu0 %v637
        %v712 = vpop.f32.mrb[0].mxu0
        %v713 = vadd.f32 0.0, %v712
        %v714 = vpop.f32.mrb[0].mxu0
        %v715 = vadd.f32 0.0, %v714
        %716 = vdwg.mxu0
        %v717 = vadd.f32 %v627, %v713
        %v718 = vadd.f32 %v629, %v715
        %v719 = vld [vmem:[%s8] sm:$0x1]
        %v721 = vlaneseq
        %v722 = vshrl.u32 %v721, 7
        %v723 = vsub.s32 0, %v722
        %v724 = vrot.slane %v719, %v723
        %v726 = vadd.f32 %v717, %v724
        %v727 = vld [vmem:[%s6] sm:$0xff]
        %v728 = vld [vmem:[%s6 + $0x8] sm:$0xff]
        %v729 = vmul.f32 %v717, %v727
        %v730 = vmul.f32 %v718, %v728
        %732 = vrot.lane.b32.xlu0 %v729, 96
        %v733 = vpop.permute.xlu0 %732
        %v735 = vadd.f32 %v729, %v733
        %736 = vrot.lane.b32.xlu0 %v729, 64
        %v737 = vpop.permute.xlu0 %736
        %v739 = vadd.f32 %v735, %v737
        %741 = vrot.lane.b32.xlu0 %v730, 32
        %v742 = vpop.permute.xlu0 %741
        %v744 = vadd.f32 %v739, %v742
        %v745 = vadd.f32 %v744, %v730
        %v746 = vld [vmem:[%s7] sm:$0xff]
        %748 = vrot.lane.b32.xlu0 %v746, 32
        %v749 = vpop.permute.xlu0 %748
        %v751 = vadd.f32 %v745, %v749
        %v752 = vmax.f32 %v751, 0.0
        %vm753 = vcmask 523520
        %v754 = vsel %vm753, %v752, -inf
        %755 = vmax.xlane.f32.xlu0 %v754
        %v756 = vpop.xlane.xlu0 %755
        %v757 = vsub.f32 %v752, %v756
        %v758 = vmul.f32 %v757, 1.442695
        %v759 = vpow.pop %v758
        %761 = vrot.lane.b32.xlu0 %v759, 96
        %v762 = vpop.permute.xlu0 %761
        %vm764 = vcmask 261120
        %v765 = vsel %vm764, %v762, 0.0
        %766 = vadd.xlane.f32.xlu0 %v765
        %v767 = vpop.xlane.xlu0 %766
        %v768 = vrcp.pop %v767
        %v769 = vmul.f32 %v759, %v768
        %771 = vrot.lane.b32.xlu0 %v769, 96
        %v772 = vpop.permute.xlu0 %771
        %v774 = vmul.f32 %v726, %v772
        %775 = vst.msk [vmem:[%s462] sm:$0xff] %vm764, %v774
        %s776 = sand.u32 %s243, 1
        %s777 = scalar_lea.sflag [#allocation4], %s776
        %s778 = sand.u32 %s243, 1
        %s779 = smul.addr %s778, 8
        %s780 = scalar_lea.vmem [#allocation13], %s779
        // Predicated region
        $region81: #{tpu_custom_call.1} parent=55 // pred_check
          %p781 = pneg %p253
        $region82: #{tpu_custom_call.1} parent=55 // pred_check_branch
          %783 = sbr.rel (%p781) target = $region84
        $region83: #{tpu_custom_call.1} parent=55 // pred_region
          %s785 = ssub.s32 128, 128
          %786 = vsyncadd %s777, %s785
          %s787 = smul.addr %s31, 128
          %s788 = scalar_lea.hbm %s9, %s787
          %s790 = sshll.u32 %s780, 4
          %s791 = int_to_ptr.vmem [resolvable:$true] %s790
          %793 = dma.vmem_to_hbm [thread:$0]  %s791, 128, %s788, %s777
        $region84: #{tpu_custom_call.1} parent=55 // pred_fallthru
          _
      $region56: #{tpu_custom_call.1} parent=5 // pred_fallthru
        _
      %p794 = scmp.le.s32.totalorder 2, %s26
      // Predicated region
      $region85: #{tpu_custom_call.1} parent=5 // pred_check
        %p795 = pneg %p794
      $region86: #{tpu_custom_call.1} parent=5 // pred_check_branch
        %797 = sbr.rel (%p795) target = $region88
      $region87: #{tpu_custom_call.1} parent=5 // pred_region
        %s798 = ssub.s32 %s26, 2
        // Predicated region
        $region89: #{tpu_custom_call.1} parent=87 // pred_check
          %p799 = pneg %p259
        $region90: #{tpu_custom_call.1} parent=87 // pred_check_branch
          %801 = sbr.rel (%p799) target = $region92
        $region91: #{tpu_custom_call.1} parent=87 // pred_region
          %s802 = sand.u32 %s244, 1
          %s803 = scalar_lea.sflag [#allocation4], %s802
          %s804 = sand.u32 %s244, 1
          %s805 = smul.addr %s804, 8
          %s806 = scalar_lea.vmem [#allocation13], %s805
          %807 = dma.done %s803, 128
        $region92: #{tpu_custom_call.1} parent=87 // pred_fallthru
          _
      $region88: #{tpu_custom_call.1} parent=5 // pred_fallthru
        _
    $region6: #{tpu_custom_call.1} parent=1 // loop_footer
      %s30 = sadd.s32 1, %s26
    $region7: #{tpu_custom_call.1} parent=1 // loop_footer_branch
      %25 = sbr.rel target = $region3
    $region8: #{tpu_custom_call.1} parent=1 // loop_exit
      _
    %808 = vsyncpa [#allocation3], 1
    %s809 = scalar_lea.sflag [#allocation3], 1
    %810 = vsyncpa %s809, 1
    %811 = vsyncpa [#allocation6], 1
    %s812 = scalar_lea.sflag [#allocation6], 1
    %813 = vsyncpa %s812, 1
    %814 = vsyncpa [#allocation9], 1
    %815 = vsyncpa [#allocation12], 1
    %816 = vsyncpa [#allocation4], 1
    %s817 = scalar_lea.sflag [#allocation4], 1
    %818 = vsyncpa %s817, 1

</llo_original>
